<compile_context>
chip_gen: v7x
topology: tpu7x:2x2x1
jax: 0.10.0
libtpu: 0.0.40
codegen_flags: <defaults>
</compile_context>

<pallas_src>
import jax
import jax.numpy as jnp
import numpy as np
from jax.experimental import pallas as pl
from jax.experimental.pallas import tpu as pltpu


def _hbm_copy_kernel(x_hbm, o_hbm):
    """Whole-array HBM->HBM DMA copy (no VMEM staging)."""

    def body(sem):
        cp = pltpu.make_async_copy(x_hbm, o_hbm, sem)
        cp.start()
        cp.wait()

    pl.run_scoped(body, pltpu.SemaphoreType.DMA(()))


def _pallas_hbm_copy(x: jax.Array) -> jax.Array:
    nbytes = x.size * jnp.dtype(x.dtype).itemsize
    return pl.pallas_call(
        _hbm_copy_kernel,
        out_shape=jax.ShapeDtypeStruct(x.shape, x.dtype),
        in_specs=[pl.BlockSpec(memory_space=pl.ANY)],
        out_specs=pl.BlockSpec(memory_space=pl.ANY),
        compiler_params=pltpu.CompilerParams(has_side_effects=True),
        cost_estimate=pl.CostEstimate(
            flops=0, transcendentals=0, bytes_accessed=2 * nbytes
        ),
    )(x)


def pointnet_part_seg_forward(x: jax.Array, *, force_copy: bool = False) -> jax.Array:
    """Forward pass of PointNetPartSeg.

    The module is the identity, so by default this returns `x` with no kernel
    launch and no HBM traffic.  Pass `force_copy=True` only if the caller
    genuinely needs a freshly materialized buffer; that path runs a single
    HBM->HBM DMA via a Pallas kernel (roofline-optimal for a copy).
    """
    if not force_copy:
        # True zero-cost identity: no pallas_call, no bytes moved.
        return x

    # Degenerate shapes: nothing worth DMAing; identity preserves semantics.
    if x.ndim == 0 or x.size == 0:
        return x

    return _pallas_hbm_copy(x)


if __name__ == "__main__":
    # Small, deterministic point-cloud style input: batch=2, channels=3 (xyz),
    # points=128 — the NCW layout a PointNet part-seg net would consume.
    key = jax.random.PRNGKey(0)
    x = jax.random.normal(key, (2, 3, 128), dtype=jnp.float32)
    expected = np.asarray(x)

    # Default (recommended) path: pure identity, no kernel.
    y_identity = jax.block_until_ready(pointnet_part_seg_forward(x))

    # Forced-copy path: exercises the Pallas HBM->HBM DMA kernel once.
    y_copy = jax.block_until_ready(pointnet_part_seg_forward(x, force_copy=True))

    for out in (y_identity, y_copy):
        assert out.shape == expected.shape and out.dtype == expected.dtype
        assert np.array_equal(np.asarray(out), expected)

    print("KERNEL_OK")
</pallas_src>

<mosaic_0001>
module attributes {stable_mosaic.version = 11 : i64} {
  func.func @_hbm_copy_kernel(%arg0: memref<2x3x128xf32, #tpu.memory_space<any>>, %arg1: memref<2x3x128xf32, #tpu.memory_space<any>>) attributes {dimension_semantics = [], scalar_prefetch = 0 : i64, scratch_operands = 0 : i64, tpu.core_type = #tpu.core_type<tc>} {
    "tpu.region"() ({
      %0 = tpu.sem_alloc : memref<!tpu.dma_semaphore, #tpu.memory_space<semaphore_mem>>
      tpu.enqueue_dma source(%arg0 : memref<2x3x128xf32, #tpu.memory_space<any>>) target(%arg1 : memref<2x3x128xf32, #tpu.memory_space<any>>) target_semaphore(%0 : memref<!tpu.dma_semaphore, #tpu.memory_space<semaphore_mem>>)
      tpu.wait_dma2 semaphore(%0 : memref<!tpu.dma_semaphore, #tpu.memory_space<semaphore_mem>>) src(%arg0 : memref<2x3x128xf32, #tpu.memory_space<any>>) dst(%arg1 : memref<2x3x128xf32, #tpu.memory_space<any>>)
      tpu.yield
    }) : () -> ()
    return
  }
}

</mosaic_0001>

<llo_original>
// kernel: tpu_custom_call.1
$region0: #{tpu_custom_call.1}
  #allocation0 [shape = 'u32[]', space=smem, size = 0x4, offset = 0x4, fixed_abs, tag = 'smem constant byte address 0x4 - core index']
  #allocation1 [shape = 'u32[144,128]{1,0:T(1,128)}', space=vmem, size = 0x12000, scoped, tag = 'internal scratch']
  #allocation3 [shape = 's32[]', space=sflag, size = 0x4, offset = 0, fixed_abs, tag = 'sflag constant byte address 0x0 - dummy sync flag']
  %s0 = inlined_call_operand.vmem [shape: f32[2,3,128], index: 0, kind: input, shape index: {}]
  %s1 = inlined_call_operand.vmem [shape: f32[2,3,128], index: 1, kind: output, shape index: {}]
  %s2 = sld [smem:[#allocation0]]
  $region33: #{tpu_custom_call.1} parent=0
    _
  %s4 = ssub.s32 1, %s2
  %s5 = scalar_select 0, %s4, %s2
  $region2: #{tpu_custom_call.1} parent=0
    #allocation2 [shape = 's32[1]{0}', space=sflag, size = 0x4, scoped, tag = 'scoped memory for tpu_custom_call.1']
    %p7 = scmp.lt.u32.totalorder 3, 8
    %p8 = pneg %p7
    // Predicated region
    $region3: #{tpu_custom_call.1} parent=2 // pred_check
      _
    $region4: #{tpu_custom_call.1} parent=2 // pred_check_branch
      %10 = sbr.rel (%p7) target = $region6
    $region5: #{tpu_custom_call.1} parent=2 // pred_region
      %s27 = sand.u32 3, 7
      %p28 = scmp.eq.s32.totalorder %s27, 0
      %p29 = pneg %p28
      // Predicated region
      $region18: #{tpu_custom_call.1} parent=5 // pred_check
        _
      $region19: #{tpu_custom_call.1} parent=5 // pred_check_branch
        %31 = sbr.rel (%p28) target = $region21
      $region20: #{tpu_custom_call.1} parent=5 // pred_region
        %s32 = sand.u32 3, 7
        %s33 = ssub.s32 3, %s32
        %s34 = scalar_lea.vmem %s0, %s33
        %s35 = ssub.s32 3, %s32
        %s36 = scalar_lea.vmem %s1, %s35
        %s37 = sshllo.u32 0, %s32
        loop: start=0, step=1, limit=1
        $region22: #{tpu_custom_call.1} parent=20 // loop_pre_header
          _
        $region23: #{tpu_custom_call.1} parent=20 // loop_header
          %s39 = sphi 0, %s43
          %p40 = scmp.ge.s32.totalorder %s39, 1
          %s44 = sphi %s34, %s34
          %s45 = sphi %s36, %s36
        $region24: #{tpu_custom_call.1} parent=20 // loop_header_branch
          %42 = sbr.rel (%p40) target = $region28
        $region25: #{tpu_custom_call.1} parent=20 // loop_body
          %v46 = vld [vmem:[%s44] sm:%s37]
          %47 = vst [vmem:[%s45] sm:%s37] %v46
          %v48 = vld [vmem:[%s44 + $0x4] sm:%s37]
          %49 = vst [vmem:[%s45 + $0x4] sm:%s37] %v48
        $region26: #{tpu_custom_call.1} parent=20 // loop_footer
          %s43 = sadd.s32 1, %s39
        $region27: #{tpu_custom_call.1} parent=20 // loop_footer_branch
          %38 = sbr.rel target = $region23
        $region28: #{tpu_custom_call.1} parent=20 // loop_exit
          _
      $region21: #{tpu_custom_call.1} parent=5 // pred_fallthru
        _
    $region6: #{tpu_custom_call.1} parent=2 // pred_fallthru
      _
    // Predicated region
    $region7: #{tpu_custom_call.1} parent=2 // pred_check
      %p11 = pneg %p7
    $region8: #{tpu_custom_call.1} parent=2 // pred_check_branch
      %13 = sbr.rel (%p11) target = $region10
    $region9: #{tpu_custom_call.1} parent=2 // pred_region
      %s14 = sshllo.u32 0, 3
      loop: start=0, step=1, limit=1
      $region11: #{tpu_custom_call.1} parent=9 // loop_pre_header
        _
      $region12: #{tpu_custom_call.1} parent=9 // loop_header
        %s16 = sphi 0, %s20
        %p17 = scmp.ge.s32.totalorder %s16, 1
        %s21 = sphi %s0, %s0
        %s22 = sphi %s1, %s1
      $region13: #{tpu_custom_call.1} parent=9 // loop_header_branch
        %19 = sbr.rel (%p17) target = $region17
      $region14: #{tpu_custom_call.1} parent=9 // loop_body
        %v23 = vld [vmem:[%s21] sm:%s14]
        %24 = vst [vmem:[%s22] sm:%s14] %v23
        %v25 = vld [vmem:[%s21 + $0x4] sm:%s14]
        %26 = vst [vmem:[%s22 + $0x4] sm:%s14] %v25
      $region15: #{tpu_custom_call.1} parent=9 // loop_footer
        %s20 = sadd.s32 1, %s16
      $region16: #{tpu_custom_call.1} parent=9 // loop_footer_branch
        %15 = sbr.rel target = $region12
      $region17: #{tpu_custom_call.1} parent=9 // loop_exit
        _
    $region10: #{tpu_custom_call.1} parent=2 // pred_fallthru
      _
    // Predicated region
    $region29: #{tpu_custom_call.1} parent=2 // pred_check
      _
    $region30: #{tpu_custom_call.1} parent=2 // pred_check_branch
      %52 = sbr.rel (0) target = $region32
    $region31: #{tpu_custom_call.1} parent=2 // pred_region
      %53 = vsyncadd [#allocation2], 96
    $region32: #{tpu_custom_call.1} parent=2 // pred_fallthru
      _
    %s54 = smul.u32 2, 3
    %s55 = smul.u32 %s54, 1
    %s56 = sshll.u32 %s55, 4
    %57 = dma.done [#allocation2], %s56

</llo_original>
